<compile_context>
chip_gen: v7x
topology: tpu7x:2x2x1
jax: 0.10.0
libtpu: 0.0.40
codegen_flags: <defaults>
</compile_context>

<pallas_src>
import jax
import jax.numpy as jnp
from jax.experimental import pallas as pl
from jax.experimental.pallas import tpu as pltpu


def decoder_step_kernel(
    xh0_ref,        # (B, E+H) f32   [embedded x | h0]
    state_ref,      # (B, 4H)  f32   [h0 | c0 | h1 | c1]   (h0 slot unused, read from xh0)
    w0_ref,         # (E+H, 4H) bf16 fused [W_ih_l0 ; W_hh_l0] (pre-transposed)
    w1_ref,         # (2H,  4H) bf16 fused [W_ih_l1 ; W_hh_l1] (pre-transposed)
    b01_ref,        # (2, 4H)  f32   row 0: layer-0 bias, row 1: layer-1 bias
    wfc_ref,        # (H, V)   bf16
    bfc_ref,        # (1, V)   f32
    pred_ref,       # (B, V)   f32   output logits
    state_out_ref,  # (B, 4H)  f32   packed [h0' | c0' | h1' | c1']
):
    H = state_ref.shape[-1] // 4

    def lstm_layer(xh_f32, c, w_ref, b):
        # gates = [x|h] @ [W_ih ; W_hh] + (b_ih + b_hh)   (single fused MXU matmul)
        z = jnp.dot(xh_f32.astype(jnp.bfloat16), w_ref[...],
                    preferred_element_type=jnp.float32) + b        # (B, 4H) f32
        # Full-vreg transcendentals (EUP); PyTorch gate order: i, f, g, o.
        s = jax.nn.sigmoid(z)
        t = jnp.tanh(z)
        i = s[:, 0 * H:1 * H]
        f = s[:, 1 * H:2 * H]
        g = t[:, 2 * H:3 * H]
        o = s[:, 3 * H:4 * H]
        c_new = f * c + i * g
        h_new = o * jnp.tanh(c_new)
        return h_new, c_new

    xh0 = xh0_ref[...]
    c0 = state_ref[:, 1 * H:2 * H]
    h1 = state_ref[:, 2 * H:3 * H]
    c1 = state_ref[:, 3 * H:4 * H]
    b0 = b01_ref[0:1, :]
    b1 = b01_ref[1:2, :]

    # Layer 0
    h0n, c0n = lstm_layer(xh0, c0, w0_ref, b0)

    # Inter-layer dropout is identity in eval mode.
    # Layer 1
    xh1 = jnp.concatenate([h0n, h1], axis=-1)                       # (B, 2H)
    h1n, c1n = lstm_layer(xh1, c1, w1_ref, b1)

    # Packed lane-dense state writeback (single (B, 4H) store).
    state_out_ref[...] = jnp.concatenate([h0n, c0n, h1n, c1n], axis=-1)

    # fc_out on the top-layer output (seq_len == 1 so output == h1n)
    pred_ref[...] = (jnp.dot(h1n.astype(jnp.bfloat16), wfc_ref[...],
                             preferred_element_type=jnp.float32)
                     + bfc_ref[...])


def make_decoder_params(key, output_dim, emb_dim, hid_dim):
    """Deterministic params matching PyTorch shapes, pre-packed for the kernel."""
    ks = jax.random.split(key, 12)
    u = lambda k, shape, s: jax.random.uniform(k, shape, jnp.float32, -s, s)
    s = 1.0 / (hid_dim ** 0.5)

    # weight_ih_l0 (4H,E) / weight_hh_l0 (4H,H) -> pre-transposed (E,4H)/(H,4H)
    wih0 = u(ks[1], (emb_dim, 4 * hid_dim), s)
    whh0 = u(ks[2], (hid_dim, 4 * hid_dim), s)
    b0 = u(ks[3], (1, 4 * hid_dim), s) + u(ks[4], (1, 4 * hid_dim), s)
    wih1 = u(ks[5], (hid_dim, 4 * hid_dim), s)
    whh1 = u(ks[6], (hid_dim, 4 * hid_dim), s)
    b1 = u(ks[7], (1, 4 * hid_dim), s) + u(ks[8], (1, 4 * hid_dim), s)
    wfc = u(ks[9], (hid_dim, output_dim), s)     # fc weight (V,H) -> transposed (H,V)
    bfc = u(ks[10], (1, output_dim), s)

    return dict(
        emb_table=u(ks[0], (output_dim, emb_dim), 1.0),
        w0=jnp.concatenate([wih0, whh0], axis=0).astype(jnp.bfloat16),  # (E+H, 4H)
        w1=jnp.concatenate([wih1, whh1], axis=0).astype(jnp.bfloat16),  # (2H, 4H)
        b01=jnp.concatenate([b0, b1], axis=0),                          # (2, 4H)
        wfc=wfc.astype(jnp.bfloat16),                                   # (H, V)
        bfc=bfc,                                                        # (1, V)
    )


def decoder_forward(params, input_ids, hidden, cell):
    """input_ids: (B,), hidden/cell: (2, B, H). Returns (pred, hidden, cell)."""
    # XLA glue: embedding gather + unsqueeze/squeeze + lane-dense packing (layout plumbing).
    x = params["emb_table"][input_ids]                                   # (B, E)
    xh0 = jnp.concatenate([x, hidden[0]], axis=-1)                       # (B, E+H)
    state_in = jnp.concatenate(
        [hidden[0], cell[0], hidden[1], cell[1]], axis=-1)               # (B, 4H)

    B = x.shape[0]
    H = hidden.shape[-1]
    V = params["wfc"].shape[-1]

    vmem = pl.BlockSpec(memory_space=pltpu.MemorySpace.VMEM)

    pred, state_out = pl.pallas_call(
        decoder_step_kernel,
        out_shape=(
            jax.ShapeDtypeStruct((B, V), jnp.float32),       # prediction
            jax.ShapeDtypeStruct((B, 4 * H), jnp.float32),   # packed new state
        ),
        in_specs=[vmem] * 7,
        out_specs=(vmem, vmem),
        input_output_aliases={1: 1},   # state_in buffer reused for state_out
    )(
        xh0, state_in,
        params["w0"], params["w1"], params["b01"],
        params["wfc"], params["bfc"],
    )

    # Unpack [h0'|c0'|h1'|c1'] -> (n_layers, B, H) via reshape/transpose (no stacks of copies).
    st = state_out.reshape(B, 2, 2, H)            # [B, layer, (h|c), H]
    new_hidden = jnp.transpose(st[:, :, 0, :], (1, 0, 2))
    new_cell = jnp.transpose(st[:, :, 1, :], (1, 0, 2))
    return pred, new_hidden, new_cell


def decoder_forward_ref(params, input_ids, hidden, cell):
    """Pure-JAX reference (mirrors the kernel's bf16 weight/activation rounding)."""
    def bdot(a, w_bf16):
        return jnp.dot(a.astype(jnp.bfloat16).astype(jnp.float32),
                       w_bf16.astype(jnp.float32))

    def lstm_layer(xh, c, w, b):
        z = bdot(xh, w) + b
        Hh = c.shape[-1]
        i = jax.nn.sigmoid(z[:, 0 * Hh:1 * Hh])
        f = jax.nn.sigmoid(z[:, 1 * Hh:2 * Hh])
        g = jnp.tanh(z[:, 2 * Hh:3 * Hh])
        o = jax.nn.sigmoid(z[:, 3 * Hh:4 * Hh])
        c_new = f * c + i * g
        return o * jnp.tanh(c_new), c_new

    x = params["emb_table"][input_ids]
    xh0 = jnp.concatenate([x, hidden[0]], axis=-1)
    h0, c0 = lstm_layer(xh0, cell[0], params["w0"], params["b01"][0:1])
    xh1 = jnp.concatenate([h0, hidden[1]], axis=-1)
    h1, c1 = lstm_layer(xh1, cell[1], params["w1"], params["b01"][1:2])
    pred = bdot(h1, params["wfc"]) + params["bfc"]
    return pred, jnp.stack([h0, h1]), jnp.stack([c0, c1])


if __name__ == "__main__":
    # Small shapes consistent with the module: n_layers=2 LSTM decoder step.
    output_dim = 128   # vocab
    emb_dim = 32
    hid_dim = 32       # 4H = 128 -> gate slab is exactly one lane-dense vreg row
    n_layers = 2
    batch = 8

    key = jax.random.PRNGKey(0)
    k_par, k_in, k_h, k_c = jax.random.split(key, 4)

    params = make_decoder_params(k_par, output_dim, emb_dim, hid_dim)
    input_ids = jax.random.randint(k_in, (batch,), 1, output_dim, dtype=jnp.int32)
    hidden = jax.random.normal(k_h, (n_layers, batch, hid_dim), jnp.float32)
    cell = jax.random.normal(k_c, (n_layers, batch, hid_dim), jnp.float32)

    fwd = jax.jit(decoder_forward)
    pred, h_new, c_new = fwd(params, input_ids, hidden, cell)
    jax.block_until_ready((pred, h_new, c_new))

    pred_r, h_r, c_r = decoder_forward_ref(params, input_ids, hidden, cell)

    assert pred.shape == (batch, output_dim)
    assert h_new.shape == (n_layers, batch, hid_dim)
    assert c_new.shape == (n_layers, batch, hid_dim)
    # bf16 weights/activations -> tolerance loosened relative to pure-f32 path.
    assert jnp.allclose(pred, pred_r, atol=1e-2, rtol=1e-2), \
        float(jnp.max(jnp.abs(pred - pred_r)))
    assert jnp.allclose(h_new, h_r, atol=1e-2, rtol=1e-2), \
        float(jnp.max(jnp.abs(h_new - h_r)))
    assert jnp.allclose(c_new, c_r, atol=1e-2, rtol=1e-2), \
        float(jnp.max(jnp.abs(c_new - c_r)))

    print("KERNEL_OK")
</pallas_src>

<mosaic_0001>
module attributes {stable_mosaic.version = 11 : i64} {
  func.func @decoder_step_kernel(%arg0: memref<8x64xf32, #tpu.memory_space<vmem>>, %arg1: memref<8x128xf32, #tpu.memory_space<vmem>>, %arg2: memref<64x128xbf16, #tpu.memory_space<vmem>>, %arg3: memref<64x128xbf16, #tpu.memory_space<vmem>>, %arg4: memref<2x128xf32, #tpu.memory_space<vmem>>, %arg5: memref<32x128xbf16, #tpu.memory_space<vmem>>, %arg6: memref<1x128xf32, #tpu.memory_space<vmem>>, %arg7: memref<8x128xf32, #tpu.memory_space<vmem>>, %arg8: memref<8x128xf32, #tpu.memory_space<vmem>>) attributes {dimension_semantics = [], scalar_prefetch = 0 : i64, scratch_operands = 0 : i64, tpu.core_type = #tpu.core_type<tc>} {
    %c0 = arith.constant 0 : index
    %c0_0 = arith.constant 0 : index
    %0 = vector.load %arg0[%c0, %c0_0] : memref<8x64xf32, #tpu.memory_space<vmem>>, vector<8x64xf32>
    %c0_1 = arith.constant 0 : index
    %c32 = arith.constant 32 : index
    %1 = vector.load %arg1[%c0_1, %c32] : memref<8x128xf32, #tpu.memory_space<vmem>>, vector<8x32xf32>
    %c0_2 = arith.constant 0 : index
    %c64 = arith.constant 64 : index
    %2 = vector.load %arg1[%c0_2, %c64] : memref<8x128xf32, #tpu.memory_space<vmem>>, vector<8x32xf32>
    %c0_3 = arith.constant 0 : index
    %c96 = arith.constant 96 : index
    %3 = vector.load %arg1[%c0_3, %c96] : memref<8x128xf32, #tpu.memory_space<vmem>>, vector<8x32xf32>
    %c0_4 = arith.constant 0 : index
    %c0_5 = arith.constant 0 : index
    %4 = vector.load %arg4[%c0_4, %c0_5] : memref<2x128xf32, #tpu.memory_space<vmem>>, vector<1x128xf32>
    %c1 = arith.constant 1 : index
    %c0_6 = arith.constant 0 : index
    %5 = vector.load %arg4[%c1, %c0_6] : memref<2x128xf32, #tpu.memory_space<vmem>>, vector<1x128xf32>
    %6 = arith.truncf %0 : vector<8x64xf32> to vector<8x64xbf16>
    %c0_7 = arith.constant 0 : index
    %c0_8 = arith.constant 0 : index
    %7 = vector.load %arg2[%c0_7, %c0_8] : memref<64x128xbf16, #tpu.memory_space<vmem>>, vector<64x128xbf16>
    %cst = arith.constant dense<0.000000e+00> : vector<8x128xf32>
    %8 = tpu.matmul %6, %7, %cst {dimension_numbers = #tpu.dot_dimension_numbers<[1], [0], [0], [1], [0, 0, 1, 1], [], []>} : vector<8x64xbf16>, vector<64x128xbf16>, vector<8x128xf32> -> vector<8x128xf32>
    %9 = vector.broadcast %4 : vector<1x128xf32> to vector<8x128xf32>
    %10 = arith.addf %8, %9 : vector<8x128xf32>
    %11 = arith.negf %10 : vector<8x128xf32>
    %12 = math.exp %11 : vector<8x128xf32>
    %cst_9 = arith.constant 1.000000e+00 : f32
    %13 = vector.broadcast %cst_9 : f32 to vector<8x128xf32>
    %14 = arith.addf %13, %12 : vector<8x128xf32>
    %15 = arith.divf %13, %14 : vector<8x128xf32>
    %16 = math.tanh %10 : vector<8x128xf32>
    %17 = vector.extract_strided_slice %15 {offsets = [0, 0], sizes = [8, 32], strides = [1, 1]} : vector<8x128xf32> to vector<8x32xf32>
    %18 = vector.extract_strided_slice %15 {offsets = [0, 32], sizes = [8, 32], strides = [1, 1]} : vector<8x128xf32> to vector<8x32xf32>
    %19 = vector.extract_strided_slice %16 {offsets = [0, 64], sizes = [8, 32], strides = [1, 1]} : vector<8x128xf32> to vector<8x32xf32>
    %20 = vector.extract_strided_slice %15 {offsets = [0, 96], sizes = [8, 32], strides = [1, 1]} : vector<8x128xf32> to vector<8x32xf32>
    %21 = arith.mulf %18, %1 : vector<8x32xf32>
    %22 = arith.mulf %17, %19 : vector<8x32xf32>
    %23 = arith.addf %21, %22 : vector<8x32xf32>
    %24 = math.tanh %23 : vector<8x32xf32>
    %25 = arith.mulf %20, %24 : vector<8x32xf32>
    %26 = tpu.concatenate %25, %2 in 1 : vector<8x32xf32>, vector<8x32xf32> -> vector<8x64xf32>
    %27 = arith.truncf %26 : vector<8x64xf32> to vector<8x64xbf16>
    %c0_10 = arith.constant 0 : index
    %c0_11 = arith.constant 0 : index
    %28 = vector.load %arg3[%c0_10, %c0_11] : memref<64x128xbf16, #tpu.memory_space<vmem>>, vector<64x128xbf16>
    %cst_12 = arith.constant dense<0.000000e+00> : vector<8x128xf32>
    %29 = tpu.matmul %27, %28, %cst_12 {dimension_numbers = #tpu.dot_dimension_numbers<[1], [0], [0], [1], [0, 0, 1, 1], [], []>} : vector<8x64xbf16>, vector<64x128xbf16>, vector<8x128xf32> -> vector<8x128xf32>
    %30 = vector.broadcast %5 : vector<1x128xf32> to vector<8x128xf32>
    %31 = arith.addf %29, %30 : vector<8x128xf32>
    %32 = arith.negf %31 : vector<8x128xf32>
    %33 = math.exp %32 : vector<8x128xf32>
    %cst_13 = arith.constant 1.000000e+00 : f32
    %34 = vector.broadcast %cst_13 : f32 to vector<8x128xf32>
    %35 = arith.addf %34, %33 : vector<8x128xf32>
    %36 = arith.divf %34, %35 : vector<8x128xf32>
    %37 = math.tanh %31 : vector<8x128xf32>
    %38 = vector.extract_strided_slice %36 {offsets = [0, 0], sizes = [8, 32], strides = [1, 1]} : vector<8x128xf32> to vector<8x32xf32>
    %39 = vector.extract_strided_slice %36 {offsets = [0, 32], sizes = [8, 32], strides = [1, 1]} : vector<8x128xf32> to vector<8x32xf32>
    %40 = vector.extract_strided_slice %37 {offsets = [0, 64], sizes = [8, 32], strides = [1, 1]} : vector<8x128xf32> to vector<8x32xf32>
    %41 = vector.extract_strided_slice %36 {offsets = [0, 96], sizes = [8, 32], strides = [1, 1]} : vector<8x128xf32> to vector<8x32xf32>
    %42 = arith.mulf %39, %3 : vector<8x32xf32>
    %43 = arith.mulf %38, %40 : vector<8x32xf32>
    %44 = arith.addf %42, %43 : vector<8x32xf32>
    %45 = math.tanh %44 : vector<8x32xf32>
    %46 = arith.mulf %41, %45 : vector<8x32xf32>
    %47 = tpu.concatenate %25, %23, %46, %44 in 1 : vector<8x32xf32>, vector<8x32xf32>, vector<8x32xf32>, vector<8x32xf32> -> vector<8x128xf32>
    %c0_14 = arith.constant 0 : index
    %c0_15 = arith.constant 0 : index
    %48 = vector.load %arg8[%c0_14, %c0_15] : memref<8x128xf32, #tpu.memory_space<vmem>>, vector<8x128xf32>
    tpu.vector_store %arg8[%c0_14, %c0_15], %47 {strides = array<i32>} : memref<8x128xf32, #tpu.memory_space<vmem>>, vector<8x128xf32>,
    %49 = arith.truncf %46 : vector<8x32xf32> to vector<8x32xbf16>
    %c0_16 = arith.constant 0 : index
    %c0_17 = arith.constant 0 : index
    %50 = vector.load %arg5[%c0_16, %c0_17] : memref<32x128xbf16, #tpu.memory_space<vmem>>, vector<32x128xbf16>
    %cst_18 = arith.constant dense<0.000000e+00> : vector<8x128xf32>
    %51 = tpu.matmul %49, %50, %cst_18 {dimension_numbers = #tpu.dot_dimension_numbers<[1], [0], [0], [1], [0, 0, 1, 1], [], []>} : vector<8x32xbf16>, vector<32x128xbf16>, vector<8x128xf32> -> vector<8x128xf32>
    %c0_19 = arith.constant 0 : index
    %c0_20 = arith.constant 0 : index
    %52 = vector.load %arg6[%c0_19, %c0_20] : memref<1x128xf32, #tpu.memory_space<vmem>>, vector<1x128xf32>
    %53 = vector.broadcast %52 : vector<1x128xf32> to vector<8x128xf32>
    %54 = arith.addf %51, %53 : vector<8x128xf32>
    %c0_21 = arith.constant 0 : index
    %c0_22 = arith.constant 0 : index
    %55 = vector.load %arg7[%c0_21, %c0_22] : memref<8x128xf32, #tpu.memory_space<vmem>>, vector<8x128xf32>
    tpu.vector_store %arg7[%c0_21, %c0_22], %54 {strides = array<i32>} : memref<8x128xf32, #tpu.memory_space<vmem>>, vector<8x128xf32>,
    return
  }
}

</mosaic_0001>

<llo_original>
// kernel: decoder_forward.1
$region0: #{decoder_forward.1}
  #allocation0 [shape = 'u32[]', space=smem, size = 0x4, offset = 0x4, fixed_abs, tag = 'smem constant byte address 0x4 - core index']
  #allocation1 [shape = 'u32[144,128]{1,0:T(1,128)}', space=vmem, size = 0x12000, scoped, tag = 'internal scratch']
  %s0 = inlined_call_operand.vmem [shape: f32[8,64], index: 0, kind: input, shape index: {}]
  %s1 = inlined_call_operand.vmem [shape: f32[8,128], index: 1, kind: input, shape index: {}, may-alias: {1,8}]
  %s2 = inlined_call_operand.vmem [shape: bf16[64,128], index: 2, kind: input, shape index: {}]
  %s3 = inlined_call_operand.vmem [shape: bf16[64,128], index: 3, kind: input, shape index: {}]
  %s4 = inlined_call_operand.vmem [shape: f32[2,128], index: 4, kind: input, shape index: {}]
  %s5 = inlined_call_operand.vmem [shape: bf16[32,128], index: 5, kind: input, shape index: {}]
  %s6 = inlined_call_operand.vmem [shape: f32[1,128], index: 6, kind: input, shape index: {}]
  %s7 = inlined_call_operand.hbm [shape: f32[8,128], index: 7, kind: output, shape index: {0}]
  %s8 = inlined_call_operand.vmem [shape: f32[8,128], index: 8, kind: output, shape index: {1}, may-alias: {1,8}]
  %9 = xla_tuple %s7, %s8
  %s10 = sld [smem:[#allocation0]]
  $region46: #{decoder_forward.1} parent=0
    _
  %s12 = ssub.s32 1, %s10
  %s13 = scalar_select 0, %s12, %s10
  $region1: #{decoder_forward.1} parent=0
    #allocation2 [shape = 'u8[4096]{0}', space=vmem, size = 0x1000, scoped, tag = 'output window, operand 0, single buffered']
    #allocation3 [shape = 's32[1]{0}', space=sflag, size = 0x4, scoped, tag = 'scoped memory for decoder_forward.1']
    %14 = vsyncpa [#allocation3], 0
    // Predicated region
    $region2: #{decoder_forward.1} parent=1 // pred_check
      _
    $region3: #{decoder_forward.1} parent=1 // pred_check_branch
      %16 = sbr.rel (0) target = $region5
    $region4: #{decoder_forward.1} parent=1 // pred_region
      _
    $region5: #{decoder_forward.1} parent=1 // pred_fallthru
      _
    // Predicated region
    $region6: #{decoder_forward.1} parent=1 // pred_check
      _
    $region7: #{decoder_forward.1} parent=1 // pred_check_branch
      %18 = sbr.rel (0) target = $region9
    $region8: #{decoder_forward.1} parent=1 // pred_region
      _
    $region9: #{decoder_forward.1} parent=1 // pred_fallthru
      _
    // Predicated region
    $region10: #{decoder_forward.1} parent=1 // pred_check
      _
    $region11: #{decoder_forward.1} parent=1 // pred_check_branch
      %20 = sbr.rel (0) target = $region13
    $region12: #{decoder_forward.1} parent=1 // pred_region
      _
    $region13: #{decoder_forward.1} parent=1 // pred_fallthru
      _
    // Predicated region
    $region14: #{decoder_forward.1} parent=1 // pred_check
      _
    $region15: #{decoder_forward.1} parent=1 // pred_check_branch
      %22 = sbr.rel (0) target = $region17
    $region16: #{decoder_forward.1} parent=1 // pred_region
      _
    $region17: #{decoder_forward.1} parent=1 // pred_fallthru
      _
    // Predicated region
    $region18: #{decoder_forward.1} parent=1 // pred_check
      _
    $region19: #{decoder_forward.1} parent=1 // pred_check_branch
      %24 = sbr.rel (0) target = $region21
    $region20: #{decoder_forward.1} parent=1 // pred_region
      _
    $region21: #{decoder_forward.1} parent=1 // pred_fallthru
      _
    // Predicated region
    $region22: #{decoder_forward.1} parent=1 // pred_check
      _
    $region23: #{decoder_forward.1} parent=1 // pred_check_branch
      %26 = sbr.rel (0) target = $region25
    $region24: #{decoder_forward.1} parent=1 // pred_region
      _
    $region25: #{decoder_forward.1} parent=1 // pred_fallthru
      _
    // Predicated region
    $region26: #{decoder_forward.1} parent=1 // pred_check
      _
    $region27: #{decoder_forward.1} parent=1 // pred_check_branch
      %28 = sbr.rel (0) target = $region29
    $region28: #{decoder_forward.1} parent=1 // pred_region
      _
    $region29: #{decoder_forward.1} parent=1 // pred_fallthru
      _
    %v30 = vld [vmem:[%s0] sm:$0xff]
    %v31 = vld [vmem:[%s1] sm:$0xff]
    %v32 = vld [vmem:[%s4] sm:$0x1]
    %v33 = vld [vmem:[%s4 + $0x1] sm:$0x1]
    %v34 = vpack.c.bf16 %v30, %v30
    %v35 = vld [vmem:[%s2] sm:$0xf]
    %v36 = vld [vmem:[%s2 + $0x4] sm:$0xf]
    %v37 = vld [vmem:[%s2 + $0x8] sm:$0xf]
    %v38 = vld [vmem:[%s2 + $0xc] sm:$0xf]
    %v39 = vld [vmem:[%s2 + $0x10] sm:$0xf]
    %v40 = vld [vmem:[%s2 + $0x14] sm:$0xf]
    %v41 = vld [vmem:[%s2 + $0x18] sm:$0xf]
    %v42 = vld [vmem:[%s2 + $0x1c] sm:$0xf]
    %v43 = vlaneseq
    %v44 = vshrl.u32 %v43, 7
    %v45 = vsub.s32 0, %v44
    %v46 = vrot.slane %v32, %v45
    %v55 = vunpack.c.l.b16 %v35
    %v56 = vunpack.c.l.b16 %v36
    %v57 = vunpack.c.l.b16 %v37
    %v58 = vunpack.c.l.b16 %v38
    %v59 = vunpack.c.l.b16 %v39
    %v60 = vunpack.c.l.b16 %v40
    %v61 = vunpack.c.l.b16 %v41
    %v62 = vunpack.c.l.b16 %v42
    %v63 = vpack.c.b16 %v56, %v55
    %v64 = vpack.c.b16 %v58, %v57
    %v65 = vpack.c.b16 %v60, %v59
    %v66 = vpack.c.b16 %v62, %v61
    %vm71 = vcmask 523264
    %v73 = vsel %vm71, %v34, 0
    %75 = vmatprep.subr.bf16.mxu0 0
    %76 = vmatpush1.bf16.msra.mxu0 %v63
    %77 = vmatprep.subr.bf16.mxu0 0
    %78 = vmatpush1.bf16.msra.mxu0 %v64
    %79 = vmatprep.subr.bf16.mxu0 0
    %80 = vmatpush1.bf16.msra.mxu0 %v65
    %81 = vmatprep.subr.bf16.mxu0 0
    %82 = vmatpush1.bf16.msra.mxu0 %v66
    %83 = vmatprep.subr.bf16.mxu0 0
    %84 = vmatpush1.bf16.msra.mxu0 0
    %85 = vmatprep.subr.bf16.mxu0 0
    %86 = vmatpush1.bf16.msra.mxu0 0
    %87 = vmatprep.subr.bf16.mxu0 0
    %88 = vmatpush1.bf16.msra.mxu0 0
    %89 = vmatprep.subr.bf16.mxu0 0
    %90 = vmatpush1.bf16.msra.mxu0 0
    %91 = vmatprep.subr.bf16.mxu0 0
    %92 = vmatpush1.bf16.msra.mxu0 0
    %93 = vmatprep.subr.bf16.mxu0 0
    %94 = vmatpush1.bf16.msra.mxu0 0
    %95 = vmatprep.subr.bf16.mxu0 0
    %96 = vmatpush1.bf16.msra.mxu0 0
    %97 = vmatprep.subr.bf16.mxu0 0
    %98 = vmatpush1.bf16.msra.mxu0 0
    %99 = vmatprep.subr.bf16.mxu0 0
    %100 = vmatpush1.bf16.msra.mxu0 0
    %101 = vmatprep.subr.bf16.mxu0 0
    %102 = vmatpush1.bf16.msra.mxu0 0
    %103 = vmatprep.subr.bf16.mxu0 0
    %104 = vmatpush1.bf16.msra.mxu0 0
    %105 = vmatprep.subr.bf16.mxu0 0
    %106 = vmatpush1.bf16.msra.mxu0 0
    %107 = vmatprep.mubr.bf16.mxu0 0
    %108 = vmatmul.mubr.bf16.gmra.mrb[0].mxu0 %v73
    %v109 = vpop.f32.mrb[0].mxu0
    %v110 = vadd.f32 %v46, %v109
    %v111 = vpop.f32.mrb[0].mxu0
    %v112 = vpop.f32.mrb[0].mxu0
    %v113 = vpop.f32.mrb[0].mxu0
    %114 = vdwg.mxu0
    %v115 = vxor.u32 %v110, 2147483648
    %v116 = vmul.f32 %v115, 1.442695
    %v117 = vpow.pop %v116
    %v118 = vadd.f32 %v117, 1.0
    %v119 = vrcp.pop %v118
    %v120 = vmul.f32 1.0, %v119
    %v121 = vtanh.pop %v110
    %v122 = vmul.f32 %v120, %v31
    %124 = vrot.lane.b32.xlu0 %v121, 64
    %v125 = vpop.permute.xlu0 %124
    %v127 = vmul.f32 %v120, %v125
    %129 = vrot.lane.b32.xlu0 %v127, 32
    %v130 = vpop.permute.xlu0 %129
    %v132 = vadd.f32 %v122, %v130
    %v133 = vtanh.pop %v132
    %135 = vrot.lane.b32.xlu0 %v133, 64
    %v136 = vpop.permute.xlu0 %135
    %v138 = vmul.f32 %v120, %v136
    %140 = vrot.lane.b32.xlu0 %v138, 32
    %v141 = vpop.permute.xlu0 %140
    %144 = vrot.lane.b32.xlu0 %v31, 96
    %v145 = vpop.permute.xlu0 %144
    %vm147 = vcmask 261120
    %v148 = vsel %vm147, %v141, %v145
    %v149 = vpack.c.bf16 %v148, %v148
    %v150 = vld [vmem:[%s3] sm:$0xf]
    %v151 = vld [vmem:[%s3 + $0x4] sm:$0xf]
    %v152 = vld [vmem:[%s3 + $0x8] sm:$0xf]
    %v153 = vld [vmem:[%s3 + $0xc] sm:$0xf]
    %v154 = vld [vmem:[%s3 + $0x10] sm:$0xf]
    %v155 = vld [vmem:[%s3 + $0x14] sm:$0xf]
    %v156 = vld [vmem:[%s3 + $0x18] sm:$0xf]
    %v157 = vld [vmem:[%s3 + $0x1c] sm:$0xf]
    %v158 = vlaneseq
    %v159 = vshrl.u32 %v158, 7
    %v160 = vsub.s32 0, %v159
    %v161 = vrot.slane %v33, %v160
    %v170 = vunpack.c.l.b16 %v150
    %v171 = vunpack.c.l.b16 %v151
    %v172 = vunpack.c.l.b16 %v152
    %v173 = vunpack.c.l.b16 %v153
    %v174 = vunpack.c.l.b16 %v154
    %v175 = vunpack.c.l.b16 %v155
    %v176 = vunpack.c.l.b16 %v156
    %v177 = vunpack.c.l.b16 %v157
    %v178 = vpack.c.b16 %v171, %v170
    %v179 = vpack.c.b16 %v173, %v172
    %v180 = vpack.c.b16 %v175, %v174
    %v181 = vpack.c.b16 %v177, %v176
    %v187 = vsel %vm71, %v149, 0
    %189 = vmatprep.subr.bf16.mxu0 0
    %190 = vmatpush1.bf16.msra.mxu0 %v178
    %191 = vmatprep.subr.bf16.mxu0 0
    %192 = vmatpush1.bf16.msra.mxu0 %v179
    %193 = vmatprep.subr.bf16.mxu0 0
    %194 = vmatpush1.bf16.msra.mxu0 %v180
    %195 = vmatprep.subr.bf16.mxu0 0
    %196 = vmatpush1.bf16.msra.mxu0 %v181
    %197 = vmatprep.subr.bf16.mxu0 0
    %198 = vmatpush1.bf16.msra.mxu0 0
    %199 = vmatprep.subr.bf16.mxu0 0
    %200 = vmatpush1.bf16.msra.mxu0 0
    %201 = vmatprep.subr.bf16.mxu0 0
    %202 = vmatpush1.bf16.msra.mxu0 0
    %203 = vmatprep.subr.bf16.mxu0 0
    %204 = vmatpush1.bf16.msra.mxu0 0
    %205 = vmatprep.subr.bf16.mxu0 0
    %206 = vmatpush1.bf16.msra.mxu0 0
    %207 = vmatprep.subr.bf16.mxu0 0
    %208 = vmatpush1.bf16.msra.mxu0 0
    %209 = vmatprep.subr.bf16.mxu0 0
    %210 = vmatpush1.bf16.msra.mxu0 0
    %211 = vmatprep.subr.bf16.mxu0 0
    %212 = vmatpush1.bf16.msra.mxu0 0
    %213 = vmatprep.subr.bf16.mxu0 0
    %214 = vmatpush1.bf16.msra.mxu0 0
    %215 = vmatprep.subr.bf16.mxu0 0
    %216 = vmatpush1.bf16.msra.mxu0 0
    %217 = vmatprep.subr.bf16.mxu0 0
    %218 = vmatpush1.bf16.msra.mxu0 0
    %219 = vmatprep.subr.bf16.mxu0 0
    %220 = vmatpush1.bf16.msra.mxu0 0
    %221 = vmatprep.mubr.bf16.mxu0 0
    %222 = vmatmul.mubr.bf16.gmra.mrb[0].mxu0 %v187
    %v223 = vpop.f32.mrb[0].mxu0
    %v224 = vadd.f32 %v161, %v223
    %v225 = vpop.f32.mrb[0].mxu0
    %v226 = vpop.f32.mrb[0].mxu0
    %v227 = vpop.f32.mrb[0].mxu0
    %228 = vdwg.mxu0
    %v229 = vxor.u32 %v224, 2147483648
    %v230 = vmul.f32 %v229, 1.442695
    %v231 = vpow.pop %v230
    %v232 = vadd.f32 %v231, 1.0
    %v233 = vrcp.pop %v232
    %v234 = vmul.f32 1.0, %v233
    %v235 = vtanh.pop %v224
    %236 = vrot.lane.b32.xlu0 %v31, 64
    %v237 = vpop.permute.xlu0 %236
    %v239 = vmul.f32 %v234, %v237
    %241 = vrot.lane.b32.xlu0 %v235, 64
    %v242 = vpop.permute.xlu0 %241
    %v244 = vmul.f32 %v234, %v242
    %246 = vrot.lane.b32.xlu0 %v244, 32
    %v247 = vpop.permute.xlu0 %246
    %v249 = vadd.f32 %v239, %v247
    %v250 = vtanh.pop %v249
    %252 = vrot.lane.b32.xlu0 %v250, 64
    %v253 = vpop.permute.xlu0 %252
    %v255 = vmul.f32 %v234, %v253
    %257 = vrot.lane.b32.xlu0 %v255, 96
    %v258 = vpop.permute.xlu0 %257
    %261 = vrot.lane.b32.xlu0 %v249, 64
    %v262 = vpop.permute.xlu0 %261
    %v264 = vsel %vm147, %v141, %v132
    %v265 = vsel %vm71, %v264, %v258
    %vm266 = vcmask 785408
    %v267 = vsel %vm266, %v265, %v262
    %268 = vst [vmem:[%s8] sm:$0xff] %v267
    %v269 = vpack.c.bf16 %v255, %v255
    %v270 = vld [vmem:[%s5] sm:$0xf]
    %v271 = vld [vmem:[%s5 + $0x4] sm:$0xf]
    %v272 = vld [vmem:[%s5 + $0x8] sm:$0xf]
    %v273 = vld [vmem:[%s5 + $0xc] sm:$0xf]
    %v274 = vld [vmem:[%s6] sm:$0x1]
    %v276 = vlaneseq
    %v277 = vshrl.u32 %v276, 7
    %v278 = vsub.s32 0, %v277
    %v279 = vrot.slane %v274, %v278
    %282 = vrot.lane.b32.xlu0 %v269, 32
    %v283 = vpop.permute.xlu0 %282
    %v288 = vunpack.c.l.b16 %v270
    %v289 = vunpack.c.l.b16 %v271
    %v290 = vunpack.c.l.b16 %v272
    %v291 = vunpack.c.l.b16 %v273
    %v292 = vpack.c.b16 %v289, %v288
    %v293 = vpack.c.b16 %v291, %v290
    %v297 = vsel %vm147, %v283, 0
    %299 = vmatprep.subr.bf16.mxu0 0
    %300 = vmatpush1.bf16.msra.mxu0 %v292
    %301 = vmatprep.subr.bf16.mxu0 0
    %302 = vmatpush1.bf16.msra.mxu0 %v293
    %303 = vmatprep.subr.bf16.mxu0 0
    %304 = vmatpush1.bf16.msra.mxu0 0
    %305 = vmatprep.subr.bf16.mxu0 0
    %306 = vmatpush1.bf16.msra.mxu0 0
    %307 = vmatprep.subr.bf16.mxu0 0
    %308 = vmatpush1.bf16.msra.mxu0 0
    %309 = vmatprep.subr.bf16.mxu0 0
    %310 = vmatpush1.bf16.msra.mxu0 0
    %311 = vmatprep.subr.bf16.mxu0 0
    %312 = vmatpush1.bf16.msra.mxu0 0
    %313 = vmatprep.subr.bf16.mxu0 0
    %314 = vmatpush1.bf16.msra.mxu0 0
    %315 = vmatprep.subr.bf16.mxu0 0
    %316 = vmatpush1.bf16.msra.mxu0 0
    %317 = vmatprep.subr.bf16.mxu0 0
    %318 = vmatpush1.bf16.msra.mxu0 0
    %319 = vmatprep.subr.bf16.mxu0 0
    %320 = vmatpush1.bf16.msra.mxu0 0
    %321 = vmatprep.subr.bf16.mxu0 0
    %322 = vmatpush1.bf16.msra.mxu0 0
    %323 = vmatprep.subr.bf16.mxu0 0
    %324 = vmatpush1.bf16.msra.mxu0 0
    %325 = vmatprep.subr.bf16.mxu0 0
    %326 = vmatpush1.bf16.msra.mxu0 0
    %327 = vmatprep.subr.bf16.mxu0 0
    %328 = vmatpush1.bf16.msra.mxu0 0
    %329 = vmatprep.subr.bf16.mxu0 0
    %330 = vmatpush1.bf16.msra.mxu0 0
    %331 = vmatprep.mubr.bf16.mxu0 0
    %332 = vmatmul.mubr.bf16.gmra.mrb[0].mxu0 %v297
    %v333 = vpop.f32.mrb[0].mxu0
    %v334 = vadd.f32 %v279, %v333
    %v335 = vpop.f32.mrb[0].mxu0
    %v336 = vpop.f32.mrb[0].mxu0
    %v337 = vpop.f32.mrb[0].mxu0
    %338 = vdwg.mxu0
    %339 = vst [vmem:[#allocation2] sm:$0xff] %v334
    // Predicated region
    $region30: #{decoder_forward.1} parent=1 // pred_check
      _
    $region31: #{decoder_forward.1} parent=1 // pred_check_branch
      %341 = sbr.rel (0) target = $region33
    $region32: #{decoder_forward.1} parent=1 // pred_region
      %s343 = ssub.s32 128, 128
      %344 = vsyncadd [#allocation3], %s343
      %s346 = sshll.u32 [#allocation2], 4
      %s347 = int_to_ptr.vmem [resolvable:$true] %s346
      %349 = dma.vmem_to_hbm [thread:$0]  %s347, 128, %s7, [#allocation3]
    $region33: #{decoder_forward.1} parent=1 // pred_fallthru
      _
    // Predicated region
    $region34: #{decoder_forward.1} parent=1 // pred_check
      _
    $region35: #{decoder_forward.1} parent=1 // pred_check_branch
      %351 = sbr.rel (0) target = $region37
    $region36: #{decoder_forward.1} parent=1 // pred_region
      _
    $region37: #{decoder_forward.1} parent=1 // pred_fallthru
      _
    // Predicated region
    $region38: #{decoder_forward.1} parent=1 // pred_check
      _
    $region39: #{decoder_forward.1} parent=1 // pred_check_branch
      %353 = sbr.rel (0) target = $region41
    $region40: #{decoder_forward.1} parent=1 // pred_region
      %354 = dma.done [#allocation3], 128
    $region41: #{decoder_forward.1} parent=1 // pred_fallthru
      _
    // Predicated region
    $region42: #{decoder_forward.1} parent=1 // pred_check
      _
    $region43: #{decoder_forward.1} parent=1 // pred_check_branch
      %356 = sbr.rel (0) target = $region45
    $region44: #{decoder_forward.1} parent=1 // pred_region
      _
    $region45: #{decoder_forward.1} parent=1 // pred_fallthru
      _
    %357 = vsyncpa [#allocation3], 1

</llo_original>
